<compile_context>
chip_gen: v6e
topology: v6e:2x2x1
jax: 0.10.0
libtpu: 0.0.40
codegen_flags: <defaults>
</compile_context>

<pallas_src>
import jax
import jax.numpy as jnp
from jax.experimental import pallas as pl
from jax.experimental.pallas import tpu as pltpu

LENGTH_W2V_VECTOR = 256          # D
HIDDEN = LENGTH_W2V_VECTOR // 2  # D // 2
NUM_CLASSES = 16                 # C
OUT_PAD = 128                    # lane-dense padded output width
TILE_B = 256                     # batch tile (multiple of 16 for bf16 packing)


def mlp_kernel(x_ref, w1_ref, b1_ref, w2_ref, b2_ref, w3_ref, b3_ref, o_ref):
    # fc1 + ReLU  (bf16 operands, f32 accumulation on the MXU)
    h1 = jnp.dot(x_ref[...], w1_ref[...], preferred_element_type=jnp.float32)
    h1 = jnp.maximum(h1 + b1_ref[...], 0.0)
    # fc2 + ReLU
    h2 = jnp.dot(h1.astype(jnp.bfloat16), w2_ref[...],
                 preferred_element_type=jnp.float32)
    h2 = jnp.maximum(h2 + b2_ref[...], 0.0)
    # fc3 (padded to 128 output lanes) + Sigmoid
    h3 = jnp.dot(h2.astype(jnp.bfloat16), w3_ref[...],
                 preferred_element_type=jnp.float32)
    h3 = h3 + b3_ref[...]
    # sigmoid = 1 / (1 + exp(-x)); exp and approx-reciprocal both go to the EUP
    o_ref[...] = pl.reciprocal(1.0 + jnp.exp(-h3), approx=True).astype(o_ref.dtype)


def net_forward(x, params):
    """x: [B, D] float32.  params: pre-transposed bf16 weights + f32 biases."""
    B, D = x.shape
    assert D == LENGTH_W2V_VECTOR
    w1, b1 = params["w1"], params["b1"]
    w2, b2 = params["w2"], params["b2"]
    w3, b3 = params["w3"], params["b3"]

    # Pad fc3 to a lane-dense 128-wide output slab (zero columns sliced later).
    w3p = jnp.pad(w3, ((0, 0), (0, OUT_PAD - NUM_CLASSES)))
    b3p = jnp.pad(b3, ((0, 0), (0, OUT_PAD - NUM_CLASSES)))

    # Pad batch up to a multiple of TILE_B; extra rows are discarded afterwards.
    Bp = pl.cdiv(B, TILE_B) * TILE_B
    xp = x.astype(jnp.bfloat16)
    if Bp != B:
        xp = jnp.pad(xp, ((0, Bp - B), (0, 0)))
    n_tiles = Bp // TILE_B

    const2 = lambda i: (0, 0)   # weights/biases: same block every grid step
    flops = 2 * Bp * (D * D + D * HIDDEN + HIDDEN * OUT_PAD)
    bytes_accessed = (xp.size * 2 + w1.size * 2 + w2.size * 2 + w3p.size * 2
                      + b1.size * 4 + b2.size * 4 + b3p.size * 4
                      + Bp * OUT_PAD * 4)

    out = pl.pallas_call(
        mlp_kernel,
        out_shape=jax.ShapeDtypeStruct((Bp, OUT_PAD), jnp.float32),
        grid=(n_tiles,),
        in_specs=[
            pl.BlockSpec((TILE_B, D), lambda i: (i, 0)),   # x: tiled on batch
            pl.BlockSpec(w1.shape, const2),
            pl.BlockSpec(b1.shape, const2),
            pl.BlockSpec(w2.shape, const2),
            pl.BlockSpec(b2.shape, const2),
            pl.BlockSpec(w3p.shape, const2),
            pl.BlockSpec(b3p.shape, const2),
        ],
        out_specs=pl.BlockSpec((TILE_B, OUT_PAD), lambda i: (i, 0)),
        compiler_params=pltpu.CompilerParams(
            dimension_semantics=("parallel",)),
        cost_estimate=pl.CostEstimate(
            flops=flops,
            transcendentals=Bp * OUT_PAD,
            bytes_accessed=bytes_accessed),
    )(xp, w1, b1, w2, b2, w3p, b3p)

    return out[:B, :NUM_CLASSES]


def init_params(key):
    """PyTorch Linear default init (U(-k, k), k = 1/sqrt(fan_in)).
    Weights stored pre-transposed [in_features, out_features] as bf16."""
    def linear(key, fan_in, fan_out):
        kw, kb = jax.random.split(key)
        bound = 1.0 / jnp.sqrt(fan_in)
        w = jax.random.uniform(kw, (fan_in, fan_out), jnp.float32, -bound, bound)
        b = jax.random.uniform(kb, (1, fan_out), jnp.float32, -bound, bound)
        return w.astype(jnp.bfloat16), b

    k1, k2, k3 = jax.random.split(key, 3)
    w1, b1 = linear(k1, LENGTH_W2V_VECTOR, LENGTH_W2V_VECTOR)
    w2, b2 = linear(k2, LENGTH_W2V_VECTOR, HIDDEN)
    w3, b3 = linear(k3, HIDDEN, NUM_CLASSES)
    return {"w1": w1, "b1": b1, "w2": w2, "b2": b2, "w3": w3, "b3": b3}


if __name__ == "__main__":
    key = jax.random.PRNGKey(0)
    kp, kx = jax.random.split(key)
    params = init_params(kp)

    BATCH = 8  # small example batch; wrapper pads to the 256-row tile
    x = jax.random.normal(kx, (BATCH, LENGTH_W2V_VECTOR), jnp.float32)

    out = net_forward(x, params)
    out = jax.block_until_ready(out)

    # Pure-JAX reference of the same bf16/f32-accumulate math.
    xb = x.astype(jnp.bfloat16)
    h = jnp.maximum(jnp.dot(xb, params["w1"],
                            preferred_element_type=jnp.float32) + params["b1"], 0.0)
    h = jnp.maximum(jnp.dot(h.astype(jnp.bfloat16), params["w2"],
                            preferred_element_type=jnp.float32) + params["b2"], 0.0)
    logits = jnp.dot(h.astype(jnp.bfloat16), params["w3"],
                     preferred_element_type=jnp.float32) + params["b3"]
    ref = jax.nn.sigmoid(logits)

    assert out.shape == (BATCH, NUM_CLASSES)
    assert jnp.allclose(out, ref, atol=1e-2, rtol=1e-2), "mismatch vs JAX reference"

    print("KERNEL_OK")
</pallas_src>

<mosaic_0001>
module attributes {stable_mosaic.version = 11 : i64} {
  func.func @mlp_kernel(%arg0: i32, %arg1: memref<256x256xbf16, #tpu.memory_space<vmem>>, %arg2: memref<256x256xbf16, #tpu.memory_space<vmem>>, %arg3: memref<1x256xf32, #tpu.memory_space<vmem>>, %arg4: memref<256x128xbf16, #tpu.memory_space<vmem>>, %arg5: memref<1x128xf32, #tpu.memory_space<vmem>>, %arg6: memref<128x128xbf16, #tpu.memory_space<vmem>>, %arg7: memref<1x128xf32, #tpu.memory_space<vmem>>, %arg8: memref<256x128xf32, #tpu.memory_space<vmem>>) attributes {dimension_semantics = [#tpu.dimension_semantics<parallel>], iteration_bounds = array<i64: 1>, scalar_prefetch = 0 : i64, scratch_operands = 0 : i64, tpu.core_type = #tpu.core_type<tc>, window_params = [{transform_indices = @transform_0, window_bounds = array<i64: 256, 256>}, {pipeline_mode = #tpu.pipeline_mode<synchronous>, transform_indices = @transform_1, window_bounds = array<i64: 256, 256>}, {pipeline_mode = #tpu.pipeline_mode<synchronous>, transform_indices = @transform_2, window_bounds = array<i64: 1, 256>}, {pipeline_mode = #tpu.pipeline_mode<synchronous>, transform_indices = @transform_3, window_bounds = array<i64: 256, 128>}, {pipeline_mode = #tpu.pipeline_mode<synchronous>, transform_indices = @transform_4, window_bounds = array<i64: 1, 128>}, {pipeline_mode = #tpu.pipeline_mode<synchronous>, transform_indices = @transform_5, window_bounds = array<i64: 128, 128>}, {pipeline_mode = #tpu.pipeline_mode<synchronous>, transform_indices = @transform_6, window_bounds = array<i64: 1, 128>}, {transform_indices = @transform_7, window_bounds = array<i64: 256, 128>}]} {
    %c0 = arith.constant 0 : index
    %c0_0 = arith.constant 0 : index
    %0 = vector.load %arg1[%c0, %c0_0] : memref<256x256xbf16, #tpu.memory_space<vmem>>, vector<256x256xbf16>
    %c0_1 = arith.constant 0 : index
    %c0_2 = arith.constant 0 : index
    %1 = vector.load %arg2[%c0_1, %c0_2] : memref<256x256xbf16, #tpu.memory_space<vmem>>, vector<256x256xbf16>
    %cst = arith.constant dense<0.000000e+00> : vector<256x256xf32>
    %2 = tpu.matmul %0, %1, %cst {dimension_numbers = #tpu.dot_dimension_numbers<[1], [0], [0], [1], [0, 0, 1, 1], [], []>} : vector<256x256xbf16>, vector<256x256xbf16>, vector<256x256xf32> -> vector<256x256xf32>
    %c0_3 = arith.constant 0 : index
    %c0_4 = arith.constant 0 : index
    %3 = vector.load %arg3[%c0_3, %c0_4] : memref<1x256xf32, #tpu.memory_space<vmem>>, vector<1x256xf32>
    %4 = vector.broadcast %3 : vector<1x256xf32> to vector<256x256xf32>
    %5 = arith.addf %2, %4 : vector<256x256xf32>
    %cst_5 = arith.constant 0.000000e+00 : f32
    %6 = vector.broadcast %cst_5 : f32 to vector<256x256xf32>
    %7 = arith.maximumf %5, %6 : vector<256x256xf32>
    %8 = arith.truncf %7 : vector<256x256xf32> to vector<256x256xbf16>
    %c0_6 = arith.constant 0 : index
    %c0_7 = arith.constant 0 : index
    %9 = vector.load %arg4[%c0_6, %c0_7] : memref<256x128xbf16, #tpu.memory_space<vmem>>, vector<256x128xbf16>
    %cst_8 = arith.constant dense<0.000000e+00> : vector<256x128xf32>
    %10 = tpu.matmul %8, %9, %cst_8 {dimension_numbers = #tpu.dot_dimension_numbers<[1], [0], [0], [1], [0, 0, 1, 1], [], []>} : vector<256x256xbf16>, vector<256x128xbf16>, vector<256x128xf32> -> vector<256x128xf32>
    %c0_9 = arith.constant 0 : index
    %c0_10 = arith.constant 0 : index
    %11 = vector.load %arg5[%c0_9, %c0_10] : memref<1x128xf32, #tpu.memory_space<vmem>>, vector<1x128xf32>
    %12 = vector.broadcast %11 : vector<1x128xf32> to vector<256x128xf32>
    %13 = arith.addf %10, %12 : vector<256x128xf32>
    %cst_11 = arith.constant 0.000000e+00 : f32
    %14 = vector.broadcast %cst_11 : f32 to vector<256x128xf32>
    %15 = arith.maximumf %13, %14 : vector<256x128xf32>
    %16 = arith.truncf %15 : vector<256x128xf32> to vector<256x128xbf16>
    %c0_12 = arith.constant 0 : index
    %c0_13 = arith.constant 0 : index
    %17 = vector.load %arg6[%c0_12, %c0_13] : memref<128x128xbf16, #tpu.memory_space<vmem>>, vector<128x128xbf16>
    %cst_14 = arith.constant dense<0.000000e+00> : vector<256x128xf32>
    %18 = tpu.matmul %16, %17, %cst_14 {dimension_numbers = #tpu.dot_dimension_numbers<[1], [0], [0], [1], [0, 0, 1, 1], [], []>} : vector<256x128xbf16>, vector<128x128xbf16>, vector<256x128xf32> -> vector<256x128xf32>
    %c0_15 = arith.constant 0 : index
    %c0_16 = arith.constant 0 : index
    %19 = vector.load %arg7[%c0_15, %c0_16] : memref<1x128xf32, #tpu.memory_space<vmem>>, vector<1x128xf32>
    %20 = vector.broadcast %19 : vector<1x128xf32> to vector<256x128xf32>
    %21 = arith.addf %18, %20 : vector<256x128xf32>
    %cst_17 = arith.constant 0.000000e+00 : f32
    %22 = vector.broadcast %cst_17 : f32 to vector<256x128xf32>
    %23 = arith.subf %22, %21 : vector<256x128xf32>
    %24 = math.exp %23 : vector<256x128xf32>
    %cst_18 = arith.constant 1.000000e+00 : f32
    %25 = vector.broadcast %cst_18 : f32 to vector<256x128xf32>
    %26 = arith.addf %25, %24 : vector<256x128xf32>
    %27 = tpu.reciprocal %26 {approx = true} : vector<256x128xf32> -> vector<256x128xf32>
    %c0_19 = arith.constant 0 : index
    %c0_20 = arith.constant 0 : index
    %28 = vector.load %arg8[%c0_19, %c0_20] : memref<256x128xf32, #tpu.memory_space<vmem>>, vector<256x128xf32>
    tpu.vector_store %arg8[%c0_19, %c0_20], %27 {strides = array<i32>} : memref<256x128xf32, #tpu.memory_space<vmem>>, vector<256x128xf32>,
    return
  }
  func.func @transform_0(%arg0: i32) -> (i32, i32) {
    %c0_i32 = arith.constant 0 : i32
    %c0_i32_0 = arith.constant 0 : i32
    return %arg0, %c0_i32 : i32, i32
  }
  func.func @transform_1(%arg0: i32) -> (i32, i32) {
    %c0_i32 = arith.constant 0 : i32
    %c0_i32_0 = arith.constant 0 : i32
    %c0_i32_1 = arith.constant 0 : i32
    return %c0_i32, %c0_i32_0 : i32, i32
  }
  func.func @transform_2(%arg0: i32) -> (i32, i32) {
    %c0_i32 = arith.constant 0 : i32
    %c0_i32_0 = arith.constant 0 : i32
    %c0_i32_1 = arith.constant 0 : i32
    return %c0_i32, %c0_i32_0 : i32, i32
  }
  func.func @transform_3(%arg0: i32) -> (i32, i32) {
    %c0_i32 = arith.constant 0 : i32
    %c0_i32_0 = arith.constant 0 : i32
    %c0_i32_1 = arith.constant 0 : i32
    return %c0_i32, %c0_i32_0 : i32, i32
  }
  func.func @transform_4(%arg0: i32) -> (i32, i32) {
    %c0_i32 = arith.constant 0 : i32
    %c0_i32_0 = arith.constant 0 : i32
    %c0_i32_1 = arith.constant 0 : i32
    return %c0_i32, %c0_i32_0 : i32, i32
  }
  func.func @transform_5(%arg0: i32) -> (i32, i32) {
    %c0_i32 = arith.constant 0 : i32
    %c0_i32_0 = arith.constant 0 : i32
    %c0_i32_1 = arith.constant 0 : i32
    return %c0_i32, %c0_i32_0 : i32, i32
  }
  func.func @transform_6(%arg0: i32) -> (i32, i32) {
    %c0_i32 = arith.constant 0 : i32
    %c0_i32_0 = arith.constant 0 : i32
    %c0_i32_1 = arith.constant 0 : i32
    return %c0_i32, %c0_i32_0 : i32, i32
  }
  func.func @transform_7(%arg0: i32) -> (i32, i32) {
    %c0_i32 = arith.constant 0 : i32
    %c0_i32_0 = arith.constant 0 : i32
    return %arg0, %c0_i32 : i32, i32
  }
}

</mosaic_0001>

<llo_original>
// kernel: tpu_custom_call.1
$region0: #{tpu_custom_call.1}
  #allocation0 [shape = 'u32[]', space=smem, size = 0x4, offset = 0x4, fixed_abs, tag = 'smem constant byte address 0x4 - core index']
  #allocation1 [shape = 'u32[144,128]{1,0:T(1,128)}', space=vmem, size = 0x12000, scoped, tag = 'internal scratch']
  %s0 = inlined_call_operand.hbm [shape: bf16[256,256], index: 0, kind: input, shape index: {}]
  %s1 = inlined_call_operand.hbm [shape: bf16[256,256], index: 1, kind: input, shape index: {}]
  %s2 = inlined_call_operand.vmem [shape: f32[1,256], index: 2, kind: input, shape index: {}]
  %s3 = inlined_call_operand.hbm [shape: bf16[256,128], index: 3, kind: input, shape index: {}]
  %s4 = inlined_call_operand.vmem [shape: f32[1,128], index: 4, kind: input, shape index: {}]
  %s5 = inlined_call_operand.hbm [shape: bf16[128,128], index: 5, kind: input, shape index: {}]
  %s6 = inlined_call_operand.vmem [shape: f32[1,128], index: 6, kind: input, shape index: {}]
  %s7 = inlined_call_operand.hbm [shape: f32[256,128], index: 7, kind: output, shape index: {}]
  %s8 = sld [smem:[#allocation0]]
  $region54: #{tpu_custom_call.1} parent=0
    _
  %s10 = ssub.s32 1, %s8
  %s11 = scalar_select 0, %s10, %s8
  $region1: #{tpu_custom_call.1} parent=0
    #allocation2 [shape = 'u8[131072]{0}', space=vmem, size = 0x20000, scoped, tag = 'input window, operand 0, single buffered']
    #allocation3 [shape = 's32[1]{0}', space=sflag, size = 0x4, scoped, tag = 'scoped memory for tpu_custom_call.1']
    #allocation4 [shape = 's32[1]{0}', space=sflag, size = 0x4, scoped, tag = 'scoped memory for tpu_custom_call.1']
    #allocation5 [shape = 'u8[131072]{0}', space=vmem, size = 0x20000, scoped, tag = 'input window, operand 1, single buffered']
    #allocation6 [shape = 's32[1]{0}', space=sflag, size = 0x4, scoped, tag = 'scoped memory for tpu_custom_call.1']
    #allocation7 [shape = 'u8[65536]{0}', space=vmem, size = 0x10000, scoped, tag = 'input window, operand 3, single buffered']
    #allocation8 [shape = 'u8[32768]{0}', space=vmem, size = 0x8000, scoped, tag = 'input window, operand 5, single buffered']
    #allocation9 [shape = 's32[1]{0}', space=sflag, size = 0x4, scoped, tag = 'scoped memory for tpu_custom_call.1']
    #allocation10 [shape = 'u8[131072]{0}', space=vmem, size = 0x20000, scoped, tag = 'output window, operand 0, single buffered']
    %12 = vsyncpa [#allocation3], 0
    %13 = vsyncpa [#allocation6], 0
    %14 = vsyncpa [#allocation9], 0
    %15 = vsyncpa [#allocation4], 0
    // Predicated region
    $region2: #{tpu_custom_call.1} parent=1 // pred_check
      _
    $region3: #{tpu_custom_call.1} parent=1 // pred_check_branch
      %17 = sbr.rel (0) target = $region5
    $region4: #{tpu_custom_call.1} parent=1 // pred_region
      %s19 = ssub.s32 4096, 4096
      %20 = vsyncadd [#allocation3], %s19
      %s21 = sshll.u32 [#allocation2], 4
      %s22 = int_to_ptr.vmem [resolvable:$true] %s21
      %27 = dma.hbm_to_vmem [thread:$0]  %s0, 4096, %s22, [#allocation3], 128, 128, 8
    $region5: #{tpu_custom_call.1} parent=1 // pred_fallthru
      _
    // Predicated region
    $region6: #{tpu_custom_call.1} parent=1 // pred_check
      _
    $region7: #{tpu_custom_call.1} parent=1 // pred_check_branch
      %29 = sbr.rel (0) target = $region9
    $region8: #{tpu_custom_call.1} parent=1 // pred_region
      %s31 = ssub.s32 4096, 4096
      %32 = vsyncadd [#allocation6], %s31
      %s33 = sshll.u32 [#allocation5], 4
      %s34 = int_to_ptr.vmem [resolvable:$true] %s33
      %39 = dma.hbm_to_vmem [thread:$0]  %s1, 4096, %s34, [#allocation6], 128, 128, 8
    $region9: #{tpu_custom_call.1} parent=1 // pred_fallthru
      _
    // Predicated region
    $region10: #{tpu_custom_call.1} parent=1 // pred_check
      _
    $region11: #{tpu_custom_call.1} parent=1 // pred_check_branch
      %41 = sbr.rel (0) target = $region13
    $region12: #{tpu_custom_call.1} parent=1 // pred_region
      _
    $region13: #{tpu_custom_call.1} parent=1 // pred_fallthru
      _
    // Predicated region
    $region14: #{tpu_custom_call.1} parent=1 // pred_check
      _
    $region15: #{tpu_custom_call.1} parent=1 // pred_check_branch
      %43 = sbr.rel (0) target = $region17
    $region16: #{tpu_custom_call.1} parent=1 // pred_region
      %s45 = ssub.s32 2048, 2048
      %46 = vsyncadd [#allocation6], %s45
      %s47 = sshll.u32 [#allocation7], 4
      %s48 = int_to_ptr.vmem [resolvable:$true] %s47
      %53 = dma.hbm_to_vmem [thread:$0]  %s3, 2048, %s48, [#allocation6], 64, 64, 4
    $region17: #{tpu_custom_call.1} parent=1 // pred_fallthru
      _
    // Predicated region
    $region18: #{tpu_custom_call.1} parent=1 // pred_check
      _
    $region19: #{tpu_custom_call.1} parent=1 // pred_check_branch
      %55 = sbr.rel (0) target = $region21
    $region20: #{tpu_custom_call.1} parent=1 // pred_region
      _
    $region21: #{tpu_custom_call.1} parent=1 // pred_fallthru
      _
    // Predicated region
    $region22: #{tpu_custom_call.1} parent=1 // pred_check
      _
    $region23: #{tpu_custom_call.1} parent=1 // pred_check_branch
      %57 = sbr.rel (0) target = $region25
    $region24: #{tpu_custom_call.1} parent=1 // pred_region
      %s59 = ssub.s32 1024, 1024
      %60 = vsyncadd [#allocation9], %s59
      %s61 = sshll.u32 [#allocation8], 4
      %s62 = int_to_ptr.vmem [resolvable:$true] %s61
      %67 = dma.hbm_to_vmem [thread:$0]  %s5, 1024, %s62, [#allocation9], 64, 64, 4
    $region25: #{tpu_custom_call.1} parent=1 // pred_fallthru
      _
    // Predicated region
    $region26: #{tpu_custom_call.1} parent=1 // pred_check
      _
    $region27: #{tpu_custom_call.1} parent=1 // pred_check_branch
      %69 = sbr.rel (0) target = $region29
    $region28: #{tpu_custom_call.1} parent=1 // pred_region
      _
    $region29: #{tpu_custom_call.1} parent=1 // pred_fallthru
      _
    // Predicated region
    $region30: #{tpu_custom_call.1} parent=1 // pred_check
      _
    $region31: #{tpu_custom_call.1} parent=1 // pred_check_branch
      %71 = sbr.rel (0) target = $region33
    $region32: #{tpu_custom_call.1} parent=1 // pred_region
      %72 = dma.done [#allocation3], 4096
    $region33: #{tpu_custom_call.1} parent=1 // pred_fallthru
      _
    // Predicated region
    $region34: #{tpu_custom_call.1} parent=1 // pred_check
      _
    $region35: #{tpu_custom_call.1} parent=1 // pred_check_branch
      %74 = sbr.rel (0) target = $region37
    $region36: #{tpu_custom_call.1} parent=1 // pred_region
      %75 = dma.done [#allocation6], 4096
    $region37: #{tpu_custom_call.1} parent=1 // pred_fallthru
      _
    // Predicated region
    $region38: #{tpu_custom_call.1} parent=1 // pred_check
      _
    $region39: #{tpu_custom_call.1} parent=1 // pred_check_branch
      %77 = sbr.rel (0) target = $region41
    $region40: #{tpu_custom_call.1} parent=1 // pred_region
      %78 = dma.done [#allocation6], 2048
    $region41: #{tpu_custom_call.1} parent=1 // pred_fallthru
      _
    // Predicated region
    $region42: #{tpu_custom_call.1} parent=1 // pred_check
      _
    $region43: #{tpu_custom_call.1} parent=1 // pred_check_branch
      %80 = sbr.rel (0) target = $region45
    $region44: #{tpu_custom_call.1} parent=1 // pred_region
      %81 = dma.done [#allocation9], 1024
    $region45: #{tpu_custom_call.1} parent=1 // pred_fallthru
      _
    %v83 = vld [vmem:[#allocation2] sm:$0xff]
    %v84 = vld [vmem:[#allocation2 + $0x8] sm:$0xff]
    %v85 = vld [vmem:[#allocation2 + $0x10] sm:$0xff]
    %v86 = vld [vmem:[#allocation2 + $0x18] sm:$0xff]
    %v87 = vld [vmem:[#allocation2 + $0x20] sm:$0xff]
    %v88 = vld [vmem:[#allocation2 + $0x28] sm:$0xff]
    %v89 = vld [vmem:[#allocation2 + $0x30] sm:$0xff]
    %v90 = vld [vmem:[#allocation2 + $0x38] sm:$0xff]
    %v91 = vld [vmem:[#allocation2 + $0x40] sm:$0xff]
    %v92 = vld [vmem:[#allocation2 + $0x48] sm:$0xff]
    %v93 = vld [vmem:[#allocation2 + $0x50] sm:$0xff]
    %v94 = vld [vmem:[#allocation2 + $0x58] sm:$0xff]
    %v95 = vld [vmem:[#allocation2 + $0x60] sm:$0xff]
    %v96 = vld [vmem:[#allocation2 + $0x68] sm:$0xff]
    %v97 = vld [vmem:[#allocation2 + $0x70] sm:$0xff]
    %v98 = vld [vmem:[#allocation2 + $0x78] sm:$0xff]
    %v99 = vld [vmem:[#allocation2 + $0x80] sm:$0xff]
    %v100 = vld [vmem:[#allocation2 + $0x88] sm:$0xff]
    %v101 = vld [vmem:[#allocation2 + $0x90] sm:$0xff]
    %v102 = vld [vmem:[#allocation2 + $0x98] sm:$0xff]
    %v103 = vld [vmem:[#allocation2 + $0xa0] sm:$0xff]
    %v104 = vld [vmem:[#allocation2 + $0xa8] sm:$0xff]
    %v105 = vld [vmem:[#allocation2 + $0xb0] sm:$0xff]
    %v106 = vld [vmem:[#allocation2 + $0xb8] sm:$0xff]
    %v107 = vld [vmem:[#allocation2 + $0xc0] sm:$0xff]
    %v108 = vld [vmem:[#allocation2 + $0xc8] sm:$0xff]
    %v109 = vld [vmem:[#allocation2 + $0xd0] sm:$0xff]
    %v110 = vld [vmem:[#allocation2 + $0xd8] sm:$0xff]
    %v111 = vld [vmem:[#allocation2 + $0xe0] sm:$0xff]
    %v112 = vld [vmem:[#allocation2 + $0xe8] sm:$0xff]
    %v113 = vld [vmem:[#allocation2 + $0xf0] sm:$0xff]
    %v114 = vld [vmem:[#allocation2 + $0xf8] sm:$0xff]
    %v115 = vld [vmem:[#allocation5] sm:$0xff]
    %v116 = vld [vmem:[#allocation5 + $0x8] sm:$0xff]
    %v117 = vld [vmem:[#allocation5 + $0x10] sm:$0xff]
    %v118 = vld [vmem:[#allocation5 + $0x18] sm:$0xff]
    %v119 = vld [vmem:[#allocation5 + $0x20] sm:$0xff]
    %v120 = vld [vmem:[#allocation5 + $0x28] sm:$0xff]
    %v121 = vld [vmem:[#allocation5 + $0x30] sm:$0xff]
    %v122 = vld [vmem:[#allocation5 + $0x38] sm:$0xff]
    %v123 = vld [vmem:[#allocation5 + $0x40] sm:$0xff]
    %v124 = vld [vmem:[#allocation5 + $0x48] sm:$0xff]
    %v125 = vld [vmem:[#allocation5 + $0x50] sm:$0xff]
    %v126 = vld [vmem:[#allocation5 + $0x58] sm:$0xff]
    %v127 = vld [vmem:[#allocation5 + $0x60] sm:$0xff]
    %v128 = vld [vmem:[#allocation5 + $0x68] sm:$0xff]
    %v129 = vld [vmem:[#allocation5 + $0x70] sm:$0xff]
    %v130 = vld [vmem:[#allocation5 + $0x78] sm:$0xff]
    %v131 = vld [vmem:[#allocation5 + $0x80] sm:$0xff]
    %v132 = vld [vmem:[#allocation5 + $0x88] sm:$0xff]
    %v133 = vld [vmem:[#allocation5 + $0x90] sm:$0xff]
    %v134 = vld [vmem:[#allocation5 + $0x98] sm:$0xff]
    %v135 = vld [vmem:[#allocation5 + $0xa0] sm:$0xff]
    %v136 = vld [vmem:[#allocation5 + $0xa8] sm:$0xff]
    %v137 = vld [vmem:[#allocation5 + $0xb0] sm:$0xff]
    %v138 = vld [vmem:[#allocation5 + $0xb8] sm:$0xff]
    %v139 = vld [vmem:[#allocation5 + $0xc0] sm:$0xff]
    %v140 = vld [vmem:[#allocation5 + $0xc8] sm:$0xff]
    %v141 = vld [vmem:[#allocation5 + $0xd0] sm:$0xff]
    %v142 = vld [vmem:[#allocation5 + $0xd8] sm:$0xff]
    %v143 = vld [vmem:[#allocation5 + $0xe0] sm:$0xff]
    %v144 = vld [vmem:[#allocation5 + $0xe8] sm:$0xff]
    %v145 = vld [vmem:[#allocation5 + $0xf0] sm:$0xff]
    %v146 = vld [vmem:[#allocation5 + $0xf8] sm:$0xff]
    %v147 = vld [vmem:[%s2] sm:$0x3]
    %v149 = vlaneseq
    %v150 = vshrl.u32 %v149, 7
    %v151 = vsub.s32 0, %v150
    %v152 = vrot.slane %v147, %v151
    %v153 = vlaneseq
    %v154 = vshrl.u32 %v153, 7
    %v155 = vsub.s32 1, %v154
    %v156 = vrot.slane %v147, %v155
    %v191 = vunpack.c.l.b16 %v83
    %v192 = vunpack.c.h.b16 %v83
    %v193 = vunpack.c.l.b16 %v84
    %v194 = vunpack.c.h.b16 %v84
    %v195 = vunpack.c.l.b16 %v85
    %v196 = vunpack.c.h.b16 %v85
    %v197 = vunpack.c.l.b16 %v86
    %v198 = vunpack.c.h.b16 %v86
    %v199 = vunpack.c.l.b16 %v87
    %v200 = vunpack.c.h.b16 %v87
    %v201 = vunpack.c.l.b16 %v88
    %v202 = vunpack.c.h.b16 %v88
    %v203 = vunpack.c.l.b16 %v89
    %v204 = vunpack.c.h.b16 %v89
    %v205 = vunpack.c.l.b16 %v90
    %v206 = vunpack.c.h.b16 %v90
    %v207 = vunpack.c.l.b16 %v91
    %v208 = vunpack.c.h.b16 %v91
    %v209 = vunpack.c.l.b16 %v92
    %v210 = vunpack.c.h.b16 %v92
    %v211 = vunpack.c.l.b16 %v93
    %v212 = vunpack.c.h.b16 %v93
    %v213 = vunpack.c.l.b16 %v94
    %v214 = vunpack.c.h.b16 %v94
    %v215 = vunpack.c.l.b16 %v95
    %v216 = vunpack.c.h.b16 %v95
    %v217 = vunpack.c.l.b16 %v96
    %v218 = vunpack.c.h.b16 %v96
    %v219 = vunpack.c.l.b16 %v97
    %v220 = vunpack.c.h.b16 %v97
    %v221 = vunpack.c.l.b16 %v98
    %v222 = vunpack.c.h.b16 %v98
    %v223 = vunpack.c.l.b16 %v99
    %v224 = vunpack.c.h.b16 %v99
    %v225 = vunpack.c.l.b16 %v100
    %v226 = vunpack.c.h.b16 %v100
    %v227 = vunpack.c.l.b16 %v101
    %v228 = vunpack.c.h.b16 %v101
    %v229 = vunpack.c.l.b16 %v102
    %v230 = vunpack.c.h.b16 %v102
    %v231 = vunpack.c.l.b16 %v103
    %v232 = vunpack.c.h.b16 %v103
    %v233 = vunpack.c.l.b16 %v104
    %v234 = vunpack.c.h.b16 %v104
    %v235 = vunpack.c.l.b16 %v105
    %v236 = vunpack.c.h.b16 %v105
    %v237 = vunpack.c.l.b16 %v106
    %v238 = vunpack.c.h.b16 %v106
    %v239 = vunpack.c.l.b16 %v107
    %v240 = vunpack.c.h.b16 %v107
    %v241 = vunpack.c.l.b16 %v108
    %v242 = vunpack.c.h.b16 %v108
    %v243 = vunpack.c.l.b16 %v109
    %v244 = vunpack.c.h.b16 %v109
    %v245 = vunpack.c.l.b16 %v110
    %v246 = vunpack.c.h.b16 %v110
    %v247 = vunpack.c.l.b16 %v111
    %v248 = vunpack.c.h.b16 %v111
    %v249 = vunpack.c.l.b16 %v112
    %v250 = vunpack.c.h.b16 %v112
    %v251 = vunpack.c.l.b16 %v113
    %v252 = vunpack.c.h.b16 %v113
    %v253 = vunpack.c.l.b16 %v114
    %v254 = vunpack.c.h.b16 %v114
    %v255 = vpack.c.b16 %v193, %v191
    %v256 = vpack.c.b16 %v194, %v192
    %v257 = vpack.c.b16 %v197, %v195
    %v258 = vpack.c.b16 %v198, %v196
    %v259 = vpack.c.b16 %v201, %v199
    %v260 = vpack.c.b16 %v202, %v200
    %v261 = vpack.c.b16 %v205, %v203
    %v262 = vpack.c.b16 %v206, %v204
    %v263 = vpack.c.b16 %v209, %v207
    %v264 = vpack.c.b16 %v210, %v208
    %v265 = vpack.c.b16 %v213, %v211
    %v266 = vpack.c.b16 %v214, %v212
    %v267 = vpack.c.b16 %v217, %v215
    %v268 = vpack.c.b16 %v218, %v216
    %v269 = vpack.c.b16 %v221, %v219
    %v270 = vpack.c.b16 %v222, %v220
    %v271 = vpack.c.b16 %v225, %v223
    %v272 = vpack.c.b16 %v226, %v224
    %v273 = vpack.c.b16 %v229, %v227
    %v274 = vpack.c.b16 %v230, %v228
    %v275 = vpack.c.b16 %v233, %v231
    %v276 = vpack.c.b16 %v234, %v232
    %v277 = vpack.c.b16 %v237, %v235
    %v278 = vpack.c.b16 %v238, %v236
    %v279 = vpack.c.b16 %v241, %v239
    %v280 = vpack.c.b16 %v242, %v240
    %v281 = vpack.c.b16 %v245, %v243
    %v282 = vpack.c.b16 %v246, %v244
    %v283 = vpack.c.b16 %v249, %v247
    %v284 = vpack.c.b16 %v250, %v248
    %v285 = vpack.c.b16 %v253, %v251
    %v286 = vpack.c.b16 %v254, %v252
    %v351 = vunpack.c.l.b16 %v115
    %v352 = vunpack.c.h.b16 %v115
    %v353 = vunpack.c.l.b16 %v116
    %v354 = vunpack.c.h.b16 %v116
    %v355 = vunpack.c.l.b16 %v117
    %v356 = vunpack.c.h.b16 %v117
    %v357 = vunpack.c.l.b16 %v118
    %v358 = vunpack.c.h.b16 %v118
    %v359 = vunpack.c.l.b16 %v119
    %v360 = vunpack.c.h.b16 %v119
    %v361 = vunpack.c.l.b16 %v120
    %v362 = vunpack.c.h.b16 %v120
    %v363 = vunpack.c.l.b16 %v121
    %v364 = vunpack.c.h.b16 %v121
    %v365 = vunpack.c.l.b16 %v122
    %v366 = vunpack.c.h.b16 %v122
    %v367 = vunpack.c.l.b16 %v123
    %v368 = vunpack.c.h.b16 %v123
    %v369 = vunpack.c.l.b16 %v124
    %v370 = vunpack.c.h.b16 %v124
    %v371 = vunpack.c.l.b16 %v125
    %v372 = vunpack.c.h.b16 %v125
    %v373 = vunpack.c.l.b16 %v126
    %v374 = vunpack.c.h.b16 %v126
    %v375 = vunpack.c.l.b16 %v127
    %v376 = vunpack.c.h.b16 %v127
    %v377 = vunpack.c.l.b16 %v128
    %v378 = vunpack.c.h.b16 %v128
    %v379 = vunpack.c.l.b16 %v129
    %v380 = vunpack.c.h.b16 %v129
    %v381 = vunpack.c.l.b16 %v130
    %v382 = vunpack.c.h.b16 %v130
    %v383 = vunpack.c.l.b16 %v131
    %v384 = vunpack.c.h.b16 %v131
    %v385 = vunpack.c.l.b16 %v132
    %v386 = vunpack.c.h.b16 %v132
    %v387 = vunpack.c.l.b16 %v133
    %v388 = vunpack.c.h.b16 %v133
    %v389 = vunpack.c.l.b16 %v134
    %v390 = vunpack.c.h.b16 %v134
    %v391 = vunpack.c.l.b16 %v135
    %v392 = vunpack.c.h.b16 %v135
    %v393 = vunpack.c.l.b16 %v136
    %v394 = vunpack.c.h.b16 %v136
    %v395 = vunpack.c.l.b16 %v137
    %v396 = vunpack.c.h.b16 %v137
    %v397 = vunpack.c.l.b16 %v138
    %v398 = vunpack.c.h.b16 %v138
    %v399 = vunpack.c.l.b16 %v139
    %v400 = vunpack.c.h.b16 %v139
    %v401 = vunpack.c.l.b16 %v140
    %v402 = vunpack.c.h.b16 %v140
    %v403 = vunpack.c.l.b16 %v141
    %v404 = vunpack.c.h.b16 %v141
    %v405 = vunpack.c.l.b16 %v142
    %v406 = vunpack.c.h.b16 %v142
    %v407 = vunpack.c.l.b16 %v143
    %v408 = vunpack.c.h.b16 %v143
    %v409 = vunpack.c.l.b16 %v144
    %v410 = vunpack.c.h.b16 %v144
    %v411 = vunpack.c.l.b16 %v145
    %v412 = vunpack.c.h.b16 %v145
    %v413 = vunpack.c.l.b16 %v146
    %v414 = vunpack.c.h.b16 %v146
    %v415 = vpack.c.b16 %v353, %v351
    %v416 = vpack.c.b16 %v354, %v352
    %v417 = vpack.c.b16 %v357, %v355
    %v418 = vpack.c.b16 %v358, %v356
    %v419 = vpack.c.b16 %v361, %v359
    %v420 = vpack.c.b16 %v362, %v360
    %v421 = vpack.c.b16 %v365, %v363
    %v422 = vpack.c.b16 %v366, %v364
    %v423 = vpack.c.b16 %v369, %v367
    %v424 = vpack.c.b16 %v370, %v368
    %v425 = vpack.c.b16 %v373, %v371
    %v426 = vpack.c.b16 %v374, %v372
    %v427 = vpack.c.b16 %v377, %v375
    %v428 = vpack.c.b16 %v378, %v376
    %v429 = vpack.c.b16 %v381, %v379
    %v430 = vpack.c.b16 %v382, %v380
    %v431 = vpack.c.b16 %v385, %v383
    %v432 = vpack.c.b16 %v386, %v384
    %v433 = vpack.c.b16 %v389, %v387
    %v434 = vpack.c.b16 %v390, %v388
    %v435 = vpack.c.b16 %v393, %v391
    %v436 = vpack.c.b16 %v394, %v392
    %v437 = vpack.c.b16 %v397, %v395
    %v438 = vpack.c.b16 %v398, %v396
    %v439 = vpack.c.b16 %v401, %v399
    %v440 = vpack.c.b16 %v402, %v400
    %v441 = vpack.c.b16 %v405, %v403
    %v442 = vpack.c.b16 %v406, %v404
    %v443 = vpack.c.b16 %v409, %v407
    %v444 = vpack.c.b16 %v410, %v408
    %v445 = vpack.c.b16 %v413, %v411
    %v446 = vpack.c.b16 %v414, %v412
    %479 = vmatprep.subr.bf16.mxu0 %v430
    %480 = vmatpush1.bf16.msra.mxu0 %v429
    %481 = vmatprep.subr.bf16.mxu0 %v428
    %482 = vmatpush1.bf16.msra.mxu0 %v427
    %483 = vmatprep.subr.bf16.mxu0 %v426
    %484 = vmatpush1.bf16.msra.mxu0 %v425
    %485 = vmatprep.subr.bf16.mxu0 %v424
    %486 = vmatpush1.bf16.msra.mxu0 %v423
    %487 = vmatprep.subr.bf16.mxu0 %v422
    %488 = vmatpush1.bf16.msra.mxu0 %v421
    %489 = vmatprep.subr.bf16.mxu0 %v420
    %490 = vmatpush1.bf16.msra.mxu0 %v419
    %491 = vmatprep.subr.bf16.mxu0 %v418
    %492 = vmatpush1.bf16.msra.mxu0 %v417
    %493 = vmatprep.subr.bf16.mxu0 %v416
    %494 = vmatpush1.bf16.msra.mxu0 %v415
    %495 = vmatprep.subr.bf16.mxu0 %v446
    %496 = vmatpush2.bf16.msra.mxu0 %v445
    %497 = vmatprep.subr.bf16.mxu0 %v444
    %498 = vmatpush2.bf16.msra.mxu0 %v443
    %499 = vmatprep.subr.bf16.mxu0 %v442
    %500 = vmatpush2.bf16.msra.mxu0 %v441
    %501 = vmatprep.subr.bf16.mxu0 %v440
    %502 = vmatpush2.bf16.msra.mxu0 %v439
    %503 = vmatprep.subr.bf16.mxu0 %v438
    %504 = vmatpush2.bf16.msra.mxu0 %v437
    %505 = vmatprep.subr.bf16.mxu0 %v436
    %506 = vmatpush2.bf16.msra.mxu0 %v435
    %507 = vmatprep.subr.bf16.mxu0 %v434
    %508 = vmatpush2.bf16.msra.mxu0 %v433
    %509 = vmatprep.subr.bf16.mxu0 %v432
    %510 = vmatpush2.bf16.msra.mxu0 %v431
    %511 = vmatprep.mubr.bf16.mxu0 %v256
    %512 = vmatmul.mubr.bf16.gmra.mxu0 %v255
    %v513 = vpop.f32.mrf.mxu0
    %v514 = vadd.f32 %v152, %v513
    %v515 = vpop.f32.mrf.mxu0
    %v516 = vadd.f32 %v156, %v515
    %v517 = vpop.f32.mrf.mxu0
    %v518 = vadd.f32 %v152, %v517
    %v519 = vpop.f32.mrf.mxu0
    %v520 = vadd.f32 %v156, %v519
    %521 = vmatprep.mubr.bf16.mxu0 %v258
    %522 = vmatmul.mubr.bf16.gmra.mxu0 %v257
    %v523 = vpop.f32.mrf.mxu0
    %v524 = vadd.f32 %v152, %v523
    %v525 = vpop.f32.mrf.mxu0
    %v526 = vadd.f32 %v156, %v525
    %v527 = vpop.f32.mrf.mxu0
    %v528 = vadd.f32 %v152, %v527
    %v529 = vpop.f32.mrf.mxu0
    %v530 = vadd.f32 %v156, %v529
    %531 = vmatprep.mubr.bf16.mxu0 %v260
    %532 = vmatmul.mubr.bf16.gmra.mxu0 %v259
    %v533 = vpop.f32.mrf.mxu0
    %v534 = vadd.f32 %v152, %v533
    %v535 = vpop.f32.mrf.mxu0
    %v536 = vadd.f32 %v156, %v535
    %v537 = vpop.f32.mrf.mxu0
    %v538 = vadd.f32 %v152, %v537
    %v539 = vpop.f32.mrf.mxu0
    %v540 = vadd.f32 %v156, %v539
    %541 = vmatprep.mubr.bf16.mxu0 %v262
    %542 = vmatmul.mubr.bf16.gmra.mxu0 %v261
    %v543 = vpop.f32.mrf.mxu0
    %v544 = vadd.f32 %v152, %v543
    %v545 = vpop.f32.mrf.mxu0
    %v546 = vadd.f32 %v156, %v545
    %v547 = vpop.f32.mrf.mxu0
    %v548 = vadd.f32 %v152, %v547
    %v549 = vpop.f32.mrf.mxu0
    %v550 = vadd.f32 %v156, %v549
    %551 = vmatprep.mubr.bf16.mxu0 %v264
    %552 = vmatmul.mubr.bf16.gmra.mxu0 %v263
    %v553 = vpop.f32.mrf.mxu0
    %v554 = vadd.f32 %v152, %v553
    %v555 = vpop.f32.mrf.mxu0
    %v556 = vadd.f32 %v156, %v555
    %v557 = vpop.f32.mrf.mxu0
    %v558 = vadd.f32 %v152, %v557
    %v559 = vpop.f32.mrf.mxu0
    %v560 = vadd.f32 %v156, %v559
    %561 = vmatprep.mubr.bf16.mxu0 %v266
    %562 = vmatmul.mubr.bf16.gmra.mxu0 %v265
    %v563 = vpop.f32.mrf.mxu0
    %v564 = vadd.f32 %v152, %v563
    %v565 = vpop.f32.mrf.mxu0
    %v566 = vadd.f32 %v156, %v565
    %v567 = vpop.f32.mrf.mxu0
    %v568 = vadd.f32 %v152, %v567
    %v569 = vpop.f32.mrf.mxu0
    %v570 = vadd.f32 %v156, %v569
    %571 = vmatprep.mubr.bf16.mxu0 %v268
    %572 = vmatmul.mubr.bf16.gmra.mxu0 %v267
    %v573 = vpop.f32.mrf.mxu0
    %v574 = vadd.f32 %v152, %v573
    %v575 = vpop.f32.mrf.mxu0
    %v576 = vadd.f32 %v156, %v575
    %v577 = vpop.f32.mrf.mxu0
    %v578 = vadd.f32 %v152, %v577
    %v579 = vpop.f32.mrf.mxu0
    %v580 = vadd.f32 %v156, %v579
    %581 = vmatprep.mubr.bf16.mxu0 %v270
    %582 = vmatmul.mubr.bf16.gmra.mxu0 %v269
    %v583 = vpop.f32.mrf.mxu0
    %v584 = vadd.f32 %v152, %v583
    %v585 = vpop.f32.mrf.mxu0
    %v586 = vadd.f32 %v156, %v585
    %v587 = vpop.f32.mrf.mxu0
    %v588 = vadd.f32 %v152, %v587
    %v589 = vpop.f32.mrf.mxu0
    %v590 = vadd.f32 %v156, %v589
    %591 = vmatprep.mubr.bf16.mxu0 %v272
    %592 = vmatmul.mubr.bf16.gmra.mxu0 %v271
    %v593 = vpop.f32.mrf.mxu0
    %v594 = vadd.f32 %v152, %v593
    %v595 = vpop.f32.mrf.mxu0
    %v596 = vadd.f32 %v156, %v595
    %v597 = vpop.f32.mrf.mxu0
    %v598 = vadd.f32 %v152, %v597
    %v599 = vpop.f32.mrf.mxu0
    %v600 = vadd.f32 %v156, %v599
    %601 = vmatprep.mubr.bf16.mxu0 %v274
    %602 = vmatmul.mubr.bf16.gmra.mxu0 %v273
    %v603 = vpop.f32.mrf.mxu0
    %v604 = vadd.f32 %v152, %v603
    %v605 = vpop.f32.mrf.mxu0
    %v606 = vadd.f32 %v156, %v605
    %v607 = vpop.f32.mrf.mxu0
    %v608 = vadd.f32 %v152, %v607
    %v609 = vpop.f32.mrf.mxu0
    %v610 = vadd.f32 %v156, %v609
    %611 = vmatprep.mubr.bf16.mxu0 %v276
    %612 = vmatmul.mubr.bf16.gmra.mxu0 %v275
    %v613 = vpop.f32.mrf.mxu0
    %v614 = vadd.f32 %v152, %v613
    %v615 = vpop.f32.mrf.mxu0
    %v616 = vadd.f32 %v156, %v615
    %v617 = vpop.f32.mrf.mxu0
    %v618 = vadd.f32 %v152, %v617
    %v619 = vpop.f32.mrf.mxu0
    %v620 = vadd.f32 %v156, %v619
    %621 = vmatprep.mubr.bf16.mxu0 %v278
    %622 = vmatmul.mubr.bf16.gmra.mxu0 %v277
    %v623 = vpop.f32.mrf.mxu0
    %v624 = vadd.f32 %v152, %v623
    %v625 = vpop.f32.mrf.mxu0
    %v626 = vadd.f32 %v156, %v625
    %v627 = vpop.f32.mrf.mxu0
    %v628 = vadd.f32 %v152, %v627
    %v629 = vpop.f32.mrf.mxu0
    %v630 = vadd.f32 %v156, %v629
    %631 = vmatprep.mubr.bf16.mxu0 %v280
    %632 = vmatmul.mubr.bf16.gmra.mxu0 %v279
    %v633 = vpop.f32.mrf.mxu0
    %v634 = vadd.f32 %v152, %v633
    %v635 = vpop.f32.mrf.mxu0
    %v636 = vadd.f32 %v156, %v635
    %v637 = vpop.f32.mrf.mxu0
    %v638 = vadd.f32 %v152, %v637
    %v639 = vpop.f32.mrf.mxu0
    %v640 = vadd.f32 %v156, %v639
    %641 = vmatprep.mubr.bf16.mxu0 %v282
    %642 = vmatmul.mubr.bf16.gmra.mxu0 %v281
    %v643 = vpop.f32.mrf.mxu0
    %v644 = vadd.f32 %v152, %v643
    %v645 = vpop.f32.mrf.mxu0
    %v646 = vadd.f32 %v156, %v645
    %v647 = vpop.f32.mrf.mxu0
    %v648 = vadd.f32 %v152, %v647
    %v649 = vpop.f32.mrf.mxu0
    %v650 = vadd.f32 %v156, %v649
    %651 = vmatprep.mubr.bf16.mxu0 %v284
    %652 = vmatmul.mubr.bf16.gmra.mxu0 %v283
    %v653 = vpop.f32.mrf.mxu0
    %v654 = vadd.f32 %v152, %v653
    %v655 = vpop.f32.mrf.mxu0
    %v656 = vadd.f32 %v156, %v655
    %v657 = vpop.f32.mrf.mxu0
    %v658 = vadd.f32 %v152, %v657
    %v659 = vpop.f32.mrf.mxu0
    %v660 = vadd.f32 %v156, %v659
    %661 = vmatprep.mubr.bf16.mxu0 %v286
    %662 = vmatmul.mubr.bf16.gmra.mxu0 %v285
    %v663 = vpop.f32.mrf.mxu0
    %v664 = vadd.f32 %v152, %v663
    %v665 = vpop.f32.mrf.mxu0
    %v666 = vadd.f32 %v156, %v665
    %v667 = vpop.f32.mrf.mxu0
    %v668 = vadd.f32 %v152, %v667
    %v669 = vpop.f32.mrf.mxu0
    %v670 = vadd.f32 %v156, %v669
    %671 = vdwg.mxu0
    %v672 = vmax.f32 %v514, 0.0
    %v673 = vmax.f32 %v516, 0.0
    %v674 = vmax.f32 %v518, 0.0
    %v675 = vmax.f32 %v520, 0.0
    %v676 = vmax.f32 %v524, 0.0
    %v677 = vmax.f32 %v526, 0.0
    %v678 = vmax.f32 %v528, 0.0
    %v679 = vmax.f32 %v530, 0.0
    %v680 = vmax.f32 %v534, 0.0
    %v681 = vmax.f32 %v536, 0.0
    %v682 = vmax.f32 %v538, 0.0
    %v683 = vmax.f32 %v540, 0.0
    %v684 = vmax.f32 %v544, 0.0
    %v685 = vmax.f32 %v546, 0.0
    %v686 = vmax.f32 %v548, 0.0
    %v687 = vmax.f32 %v550, 0.0
    %v688 = vmax.f32 %v554, 0.0
    %v689 = vmax.f32 %v556, 0.0
    %v690 = vmax.f32 %v558, 0.0
    %v691 = vmax.f32 %v560, 0.0
    %v692 = vmax.f32 %v564, 0.0
    %v693 = vmax.f32 %v566, 0.0
    %v694 = vmax.f32 %v568, 0.0
    %v695 = vmax.f32 %v570, 0.0
    %v696 = vmax.f32 %v574, 0.0
    %v697 = vmax.f32 %v576, 0.0
    %v698 = vmax.f32 %v578, 0.0
    %v699 = vmax.f32 %v580, 0.0
    %v700 = vmax.f32 %v584, 0.0
    %v701 = vmax.f32 %v586, 0.0
    %v702 = vmax.f32 %v588, 0.0
    %v703 = vmax.f32 %v590, 0.0
    %v704 = vmax.f32 %v594, 0.0
    %v705 = vmax.f32 %v596, 0.0
    %v706 = vmax.f32 %v598, 0.0
    %v707 = vmax.f32 %v600, 0.0
    %v708 = vmax.f32 %v604, 0.0
    %v709 = vmax.f32 %v606, 0.0
    %v710 = vmax.f32 %v608, 0.0
    %v711 = vmax.f32 %v610, 0.0
    %v712 = vmax.f32 %v614, 0.0
    %v713 = vmax.f32 %v616, 0.0
    %v714 = vmax.f32 %v618, 0.0
    %v715 = vmax.f32 %v620, 0.0
    %v716 = vmax.f32 %v624, 0.0
    %v717 = vmax.f32 %v626, 0.0
    %v718 = vmax.f32 %v628, 0.0
    %v719 = vmax.f32 %v630, 0.0
    %v720 = vmax.f32 %v634, 0.0
    %v721 = vmax.f32 %v636, 0.0
    %v722 = vmax.f32 %v638, 0.0
    %v723 = vmax.f32 %v640, 0.0
    %v724 = vmax.f32 %v644, 0.0
    %v725 = vmax.f32 %v646, 0.0
    %v726 = vmax.f32 %v648, 0.0
    %v727 = vmax.f32 %v650, 0.0
    %v728 = vmax.f32 %v654, 0.0
    %v729 = vmax.f32 %v656, 0.0
    %v730 = vmax.f32 %v658, 0.0
    %v731 = vmax.f32 %v660, 0.0
    %v732 = vmax.f32 %v664, 0.0
    %v733 = vmax.f32 %v666, 0.0
    %v734 = vmax.f32 %v668, 0.0
    %v735 = vmax.f32 %v670, 0.0
    %v736 = vpack.c.bf16 %v674, %v672
    %v737 = vpack.c.bf16 %v675, %v673
    %v738 = vpack.c.bf16 %v678, %v676
    %v739 = vpack.c.bf16 %v679, %v677
    %v740 = vpack.c.bf16 %v682, %v680
    %v741 = vpack.c.bf16 %v683, %v681
    %v742 = vpack.c.bf16 %v686, %v684
    %v743 = vpack.c.bf16 %v687, %v685
    %v744 = vpack.c.bf16 %v690, %v688
    %v745 = vpack.c.bf16 %v691, %v689
    %v746 = vpack.c.bf16 %v694, %v692
    %v747 = vpack.c.bf16 %v695, %v693
    %v748 = vpack.c.bf16 %v698, %v696
    %v749 = vpack.c.bf16 %v699, %v697
    %v750 = vpack.c.bf16 %v702, %v700
    %v751 = vpack.c.bf16 %v703, %v701
    %v752 = vpack.c.bf16 %v706, %v704
    %v753 = vpack.c.bf16 %v707, %v705
    %v754 = vpack.c.bf16 %v710, %v708
    %v755 = vpack.c.bf16 %v711, %v709
    %v756 = vpack.c.bf16 %v714, %v712
    %v757 = vpack.c.bf16 %v715, %v713
    %v758 = vpack.c.bf16 %v718, %v716
    %v759 = vpack.c.bf16 %v719, %v717
    %v760 = vpack.c.bf16 %v722, %v720
    %v761 = vpack.c.bf16 %v723, %v721
    %v762 = vpack.c.bf16 %v726, %v724
    %v763 = vpack.c.bf16 %v727, %v725
    %v764 = vpack.c.bf16 %v730, %v728
    %v765 = vpack.c.bf16 %v731, %v729
    %v766 = vpack.c.bf16 %v734, %v732
    %v767 = vpack.c.bf16 %v735, %v733
    %v768 = vld [vmem:[#allocation7] sm:$0xf]
    %v769 = vld [vmem:[#allocation7 + $0x4] sm:$0xf]
    %v770 = vld [vmem:[#allocation7 + $0x8] sm:$0xf]
    %v771 = vld [vmem:[#allocation7 + $0xc] sm:$0xf]
    %v772 = vld [vmem:[#allocation7 + $0x10] sm:$0xf]
    %v773 = vld [vmem:[#allocation7 + $0x14] sm:$0xf]
    %v774 = vld [vmem:[#allocation7 + $0x18] sm:$0xf]
    %v775 = vld [vmem:[#allocation7 + $0x1c] sm:$0xf]
    %v776 = vld [vmem:[#allocation7 + $0x20] sm:$0xf]
    %v777 = vld [vmem:[#allocation7 + $0x24] sm:$0xf]
    %v778 = vld [vmem:[#allocation7 + $0x28] sm:$0xf]
    %v779 = vld [vmem:[#allocation7 + $0x2c] sm:$0xf]
    %v780 = vld [vmem:[#allocation7 + $0x30] sm:$0xf]
    %v781 = vld [vmem:[#allocation7 + $0x34] sm:$0xf]
    %v782 = vld [vmem:[#allocation7 + $0x38] sm:$0xf]
    %v783 = vld [vmem:[#allocation7 + $0x3c] sm:$0xf]
    %v784 = vld [vmem:[#allocation7 + $0x40] sm:$0xf]
    %v785 = vld [vmem:[#allocation7 + $0x44] sm:$0xf]
    %v786 = vld [vmem:[#allocation7 + $0x48] sm:$0xf]
    %v787 = vld [vmem:[#allocation7 + $0x4c] sm:$0xf]
    %v788 = vld [vmem:[#allocation7 + $0x50] sm:$0xf]
    %v789 = vld [vmem:[#allocation7 + $0x54] sm:$0xf]
    %v790 = vld [vmem:[#allocation7 + $0x58] sm:$0xf]
    %v791 = vld [vmem:[#allocation7 + $0x5c] sm:$0xf]
    %v792 = vld [vmem:[#allocation7 + $0x60] sm:$0xf]
    %v793 = vld [vmem:[#allocation7 + $0x64] sm:$0xf]
    %v794 = vld [vmem:[#allocation7 + $0x68] sm:$0xf]
    %v795 = vld [vmem:[#allocation7 + $0x6c] sm:$0xf]
    %v796 = vld [vmem:[#allocation7 + $0x70] sm:$0xf]
    %v797 = vld [vmem:[#allocation7 + $0x74] sm:$0xf]
    %v798 = vld [vmem:[#allocation7 + $0x78] sm:$0xf]
    %v799 = vld [vmem:[#allocation7 + $0x7c] sm:$0xf]
    %v800 = vld [vmem:[%s4] sm:$0x1]
    %v802 = vlaneseq
    %v803 = vshrl.u32 %v802, 7
    %v804 = vsub.s32 0, %v803
    %v805 = vrot.slane %v800, %v804
    %v839 = vunpack.c.l.b16 %v768
    %v840 = vunpack.c.l.b16 %v769
    %v841 = vunpack.c.l.b16 %v770
    %v842 = vunpack.c.l.b16 %v771
    %v843 = vunpack.c.l.b16 %v772
    %v844 = vunpack.c.l.b16 %v773
    %v845 = vunpack.c.l.b16 %v774
    %v846 = vunpack.c.l.b16 %v775
    %v847 = vunpack.c.l.b16 %v776
    %v848 = vunpack.c.l.b16 %v777
    %v849 = vunpack.c.l.b16 %v778
    %v850 = vunpack.c.l.b16 %v779
    %v851 = vunpack.c.l.b16 %v780
    %v852 = vunpack.c.l.b16 %v781
    %v853 = vunpack.c.l.b16 %v782
    %v854 = vunpack.c.l.b16 %v783
    %v855 = vunpack.c.l.b16 %v784
    %v856 = vunpack.c.l.b16 %v785
    %v857 = vunpack.c.l.b16 %v786
    %v858 = vunpack.c.l.b16 %v787
    %v859 = vunpack.c.l.b16 %v788
    %v860 = vunpack.c.l.b16 %v789
    %v861 = vunpack.c.l.b16 %v790
    %v862 = vunpack.c.l.b16 %v791
    %v863 = vunpack.c.l.b16 %v792
    %v864 = vunpack.c.l.b16 %v793
    %v865 = vunpack.c.l.b16 %v794
    %v866 = vunpack.c.l.b16 %v795
    %v867 = vunpack.c.l.b16 %v796
    %v868 = vunpack.c.l.b16 %v797
    %v869 = vunpack.c.l.b16 %v798
    %v870 = vunpack.c.l.b16 %v799
    %v871 = vpack.c.b16 %v840, %v839
    %v872 = vpack.c.b16 %v842, %v841
    %v873 = vpack.c.b16 %v844, %v843
    %v874 = vpack.c.b16 %v846, %v845
    %v875 = vpack.c.b16 %v848, %v847
    %v876 = vpack.c.b16 %v850, %v849
    %v877 = vpack.c.b16 %v852, %v851
    %v878 = vpack.c.b16 %v854, %v853
    %v879 = vpack.c.b16 %v856, %v855
    %v880 = vpack.c.b16 %v858, %v857
    %v881 = vpack.c.b16 %v860, %v859
    %v882 = vpack.c.b16 %v862, %v861
    %v883 = vpack.c.b16 %v864, %v863
    %v884 = vpack.c.b16 %v866, %v865
    %v885 = vpack.c.b16 %v868, %v867
    %v886 = vpack.c.b16 %v870, %v869
    %903 = vmatprep.subr.bf16.mxu0 0
    %904 = vmatpush1.bf16.msra.mxu0 %v878
    %905 = vmatprep.subr.bf16.mxu0 0
    %906 = vmatpush1.bf16.msra.mxu0 %v877
    %907 = vmatprep.subr.bf16.mxu0 0
    %908 = vmatpush1.bf16.msra.mxu0 %v876
    %909 = vmatprep.subr.bf16.mxu0 0
    %910 = vmatpush1.bf16.msra.mxu0 %v875
    %911 = vmatprep.subr.bf16.mxu0 0
    %912 = vmatpush1.bf16.msra.mxu0 %v874
    %913 = vmatprep.subr.bf16.mxu0 0
    %914 = vmatpush1.bf16.msra.mxu0 %v873
    %915 = vmatprep.subr.bf16.mxu0 0
    %916 = vmatpush1.bf16.msra.mxu0 %v872
    %917 = vmatprep.subr.bf16.mxu0 0
    %918 = vmatpush1.bf16.msra.mxu0 %v871
    %919 = vmatprep.subr.bf16.mxu0 0
    %920 = vmatpush2.bf16.msra.mxu0 %v886
    %921 = vmatprep.subr.bf16.mxu0 0
    %922 = vmatpush2.bf16.msra.mxu0 %v885
    %923 = vmatprep.subr.bf16.mxu0 0
    %924 = vmatpush2.bf16.msra.mxu0 %v884
    %925 = vmatprep.subr.bf16.mxu0 0
    %926 = vmatpush2.bf16.msra.mxu0 %v883
    %927 = vmatprep.subr.bf16.mxu0 0
    %928 = vmatpush2.bf16.msra.mxu0 %v882
    %929 = vmatprep.subr.bf16.mxu0 0
    %930 = vmatpush2.bf16.msra.mxu0 %v881
    %931 = vmatprep.subr.bf16.mxu0 0
    %932 = vmatpush2.bf16.msra.mxu0 %v880
    %933 = vmatprep.subr.bf16.mxu0 0
    %934 = vmatpush2.bf16.msra.mxu0 %v879
    %935 = vmatprep.mubr.bf16.mxu0 %v737
    %936 = vmatmul.mubr.bf16.gmra.mxu0 %v736
    %v937 = vpop.f32.mrf.mxu0
    %v938 = vadd.f32 %v805, %v937
    %v939 = vpop.f32.mrf.mxu0
    %v940 = vpop.f32.mrf.mxu0
    %v941 = vadd.f32 %v805, %v940
    %v942 = vpop.f32.mrf.mxu0
    %943 = vmatprep.mubr.bf16.mxu0 %v739
    %944 = vmatmul.mubr.bf16.gmra.mxu0 %v738
    %v945 = vpop.f32.mrf.mxu0
    %v946 = vadd.f32 %v805, %v945
    %v947 = vpop.f32.mrf.mxu0
    %v948 = vpop.f32.mrf.mxu0
    %v949 = vadd.f32 %v805, %v948
    %v950 = vpop.f32.mrf.mxu0
    %951 = vmatprep.mubr.bf16.mxu0 %v741
    %952 = vmatmul.mubr.bf16.gmra.mxu0 %v740
    %v953 = vpop.f32.mrf.mxu0
    %v954 = vadd.f32 %v805, %v953
    %v955 = vpop.f32.mrf.mxu0
    %v956 = vpop.f32.mrf.mxu0
    %v957 = vadd.f32 %v805, %v956
    %v958 = vpop.f32.mrf.mxu0
    %959 = vmatprep.mubr.bf16.mxu0 %v743
    %960 = vmatmul.mubr.bf16.gmra.mxu0 %v742
    %v961 = vpop.f32.mrf.mxu0
    %v962 = vadd.f32 %v805, %v961
    %v963 = vpop.f32.mrf.mxu0
    %v964 = vpop.f32.mrf.mxu0
    %v965 = vadd.f32 %v805, %v964
    %v966 = vpop.f32.mrf.mxu0
    %967 = vmatprep.mubr.bf16.mxu0 %v745
    %968 = vmatmul.mubr.bf16.gmra.mxu0 %v744
    %v969 = vpop.f32.mrf.mxu0
    %v970 = vadd.f32 %v805, %v969
    %v971 = vpop.f32.mrf.mxu0
    %v972 = vpop.f32.mrf.mxu0
    %v973 = vadd.f32 %v805, %v972
    %v974 = vpop.f32.mrf.mxu0
    %975 = vmatprep.mubr.bf16.mxu0 %v747
    %976 = vmatmul.mubr.bf16.gmra.mxu0 %v746
    %v977 = vpop.f32.mrf.mxu0
    %v978 = vadd.f32 %v805, %v977
    %v979 = vpop.f32.mrf.mxu0
    %v980 = vpop.f32.mrf.mxu0
    %v981 = vadd.f32 %v805, %v980
    %v982 = vpop.f32.mrf.mxu0
    %983 = vmatprep.mubr.bf16.mxu0 %v749
    %984 = vmatmul.mubr.bf16.gmra.mxu0 %v748
    %v985 = vpop.f32.mrf.mxu0
    %v986 = vadd.f32 %v805, %v985
    %v987 = vpop.f32.mrf.mxu0
    %v988 = vpop.f32.mrf.mxu0
    %v989 = vadd.f32 %v805, %v988
    %v990 = vpop.f32.mrf.mxu0
    %991 = vmatprep.mubr.bf16.mxu0 %v751
    %992 = vmatmul.mubr.bf16.gmra.mxu0 %v750
    %v993 = vpop.f32.mrf.mxu0
    %v994 = vadd.f32 %v805, %v993
    %v995 = vpop.f32.mrf.mxu0
    %v996 = vpop.f32.mrf.mxu0
    %v997 = vadd.f32 %v805, %v996
    %v998 = vpop.f32.mrf.mxu0
    %999 = vmatprep.mubr.bf16.mxu0 %v753
    %1000 = vmatmul.mubr.bf16.gmra.mxu0 %v752
    %v1001 = vpop.f32.mrf.mxu0
    %v1002 = vadd.f32 %v805, %v1001
    %v1003 = vpop.f32.mrf.mxu0
    %v1004 = vpop.f32.mrf.mxu0
    %v1005 = vadd.f32 %v805, %v1004
    %v1006 = vpop.f32.mrf.mxu0
    %1007 = vmatprep.mubr.bf16.mxu0 %v755
    %1008 = vmatmul.mubr.bf16.gmra.mxu0 %v754
    %v1009 = vpop.f32.mrf.mxu0
    %v1010 = vadd.f32 %v805, %v1009
    %v1011 = vpop.f32.mrf.mxu0
    %v1012 = vpop.f32.mrf.mxu0
    %v1013 = vadd.f32 %v805, %v1012
    %v1014 = vpop.f32.mrf.mxu0
    %1015 = vmatprep.mubr.bf16.mxu0 %v757
    %1016 = vmatmul.mubr.bf16.gmra.mxu0 %v756
    %v1017 = vpop.f32.mrf.mxu0
    %v1018 = vadd.f32 %v805, %v1017
    %v1019 = vpop.f32.mrf.mxu0
    %v1020 = vpop.f32.mrf.mxu0
    %v1021 = vadd.f32 %v805, %v1020
    %v1022 = vpop.f32.mrf.mxu0
    %1023 = vmatprep.mubr.bf16.mxu0 %v759
    %1024 = vmatmul.mubr.bf16.gmra.mxu0 %v758
    %v1025 = vpop.f32.mrf.mxu0
    %v1026 = vadd.f32 %v805, %v1025
    %v1027 = vpop.f32.mrf.mxu0
    %v1028 = vpop.f32.mrf.mxu0
    %v1029 = vadd.f32 %v805, %v1028
    %v1030 = vpop.f32.mrf.mxu0
    %1031 = vmatprep.mubr.bf16.mxu0 %v761
    %1032 = vmatmul.mubr.bf16.gmra.mxu0 %v760
    %v1033 = vpop.f32.mrf.mxu0
    %v1034 = vadd.f32 %v805, %v1033
    %v1035 = vpop.f32.mrf.mxu0
    %v1036 = vpop.f32.mrf.mxu0
    %v1037 = vadd.f32 %v805, %v1036
    %v1038 = vpop.f32.mrf.mxu0
    %1039 = vmatprep.mubr.bf16.mxu0 %v763
    %1040 = vmatmul.mubr.bf16.gmra.mxu0 %v762
    %v1041 = vpop.f32.mrf.mxu0
    %v1042 = vadd.f32 %v805, %v1041
    %v1043 = vpop.f32.mrf.mxu0
    %v1044 = vpop.f32.mrf.mxu0
    %v1045 = vadd.f32 %v805, %v1044
    %v1046 = vpop.f32.mrf.mxu0
    %1047 = vmatprep.mubr.bf16.mxu0 %v765
    %1048 = vmatmul.mubr.bf16.gmra.mxu0 %v764
    %v1049 = vpop.f32.mrf.mxu0
    %v1050 = vadd.f32 %v805, %v1049
    %v1051 = vpop.f32.mrf.mxu0
    %v1052 = vpop.f32.mrf.mxu0
    %v1053 = vadd.f32 %v805, %v1052
    %v1054 = vpop.f32.mrf.mxu0
    %1055 = vmatprep.mubr.bf16.mxu0 %v767
    %1056 = vmatmul.mubr.bf16.gmra.mxu0 %v766
    %v1057 = vpop.f32.mrf.mxu0
    %v1058 = vadd.f32 %v805, %v1057
    %v1059 = vpop.f32.mrf.mxu0
    %v1060 = vpop.f32.mrf.mxu0
    %v1061 = vadd.f32 %v805, %v1060
    %v1062 = vpop.f32.mrf.mxu0
    %1063 = vdwg.mxu0
    %v1064 = vmax.f32 %v938, 0.0
    %v1065 = vmax.f32 %v941, 0.0
    %v1066 = vmax.f32 %v946, 0.0
    %v1067 = vmax.f32 %v949, 0.0
    %v1068 = vmax.f32 %v954, 0.0
    %v1069 = vmax.f32 %v957, 0.0
    %v1070 = vmax.f32 %v962, 0.0
    %v1071 = vmax.f32 %v965, 0.0
    %v1072 = vmax.f32 %v970, 0.0
    %v1073 = vmax.f32 %v973, 0.0
    %v1074 = vmax.f32 %v978, 0.0
    %v1075 = vmax.f32 %v981, 0.0
    %v1076 = vmax.f32 %v986, 0.0
    %v1077 = vmax.f32 %v989, 0.0
    %v1078 = vmax.f32 %v994, 0.0
    %v1079 = vmax.f32 %v997, 0.0
    %v1080 = vmax.f32 %v1002, 0.0
    %v1081 = vmax.f32 %v1005, 0.0
    %v1082 = vmax.f32 %v1010, 0.0
    %v1083 = vmax.f32 %v1013, 0.0
    %v1084 = vmax.f32 %v1018, 0.0
    %v1085 = vmax.f32 %v1021, 0.0
    %v1086 = vmax.f32 %v1026, 0.0
    %v1087 = vmax.f32 %v1029, 0.0
    %v1088 = vmax.f32 %v1034, 0.0
    %v1089 = vmax.f32 %v1037, 0.0
    %v1090 = vmax.f32 %v1042, 0.0
    %v1091 = vmax.f32 %v1045, 0.0
    %v1092 = vmax.f32 %v1050, 0.0
    %v1093 = vmax.f32 %v1053, 0.0
    %v1094 = vmax.f32 %v1058, 0.0
    %v1095 = vmax.f32 %v1061, 0.0
    %v1096 = vpack.c.bf16 %v1065, %v1064
    %v1097 = vpack.c.bf16 %v1067, %v1066
    %v1098 = vpack.c.bf16 %v1069, %v1068
    %v1099 = vpack.c.bf16 %v1071, %v1070
    %v1100 = vpack.c.bf16 %v1073, %v1072
    %v1101 = vpack.c.bf16 %v1075, %v1074
    %v1102 = vpack.c.bf16 %v1077, %v1076
    %v1103 = vpack.c.bf16 %v1079, %v1078
    %v1104 = vpack.c.bf16 %v1081, %v1080
    %v1105 = vpack.c.bf16 %v1083, %v1082
    %v1106 = vpack.c.bf16 %v1085, %v1084
    %v1107 = vpack.c.bf16 %v1087, %v1086
    %v1108 = vpack.c.bf16 %v1089, %v1088
    %v1109 = vpack.c.bf16 %v1091, %v1090
    %v1110 = vpack.c.bf16 %v1093, %v1092
    %v1111 = vpack.c.bf16 %v1095, %v1094
    %v1112 = vld [vmem:[#allocation8] sm:$0xf]
    %v1113 = vld [vmem:[#allocation8 + $0x4] sm:$0xf]
    %v1114 = vld [vmem:[#allocation8 + $0x8] sm:$0xf]
    %v1115 = vld [vmem:[#allocation8 + $0xc] sm:$0xf]
    %v1116 = vld [vmem:[#allocation8 + $0x10] sm:$0xf]
    %v1117 = vld [vmem:[#allocation8 + $0x14] sm:$0xf]
    %v1118 = vld [vmem:[#allocation8 + $0x18] sm:$0xf]
    %v1119 = vld [vmem:[#allocation8 + $0x1c] sm:$0xf]
    %v1120 = vld [vmem:[#allocation8 + $0x20] sm:$0xf]
    %v1121 = vld [vmem:[#allocation8 + $0x24] sm:$0xf]
    %v1122 = vld [vmem:[#allocation8 + $0x28] sm:$0xf]
    %v1123 = vld [vmem:[#allocation8 + $0x2c] sm:$0xf]
    %v1124 = vld [vmem:[#allocation8 + $0x30] sm:$0xf]
    %v1125 = vld [vmem:[#allocation8 + $0x34] sm:$0xf]
    %v1126 = vld [vmem:[#allocation8 + $0x38] sm:$0xf]
    %v1127 = vld [vmem:[#allocation8 + $0x3c] sm:$0xf]
    %v1128 = vld [vmem:[%s6] sm:$0x1]
    %v1130 = vlaneseq
    %v1131 = vshrl.u32 %v1130, 7
    %v1132 = vsub.s32 0, %v1131
    %v1133 = vrot.slane %v1128, %v1132
    %v1151 = vunpack.c.l.b16 %v1112
    %v1152 = vunpack.c.l.b16 %v1113
    %v1153 = vunpack.c.l.b16 %v1114
    %v1154 = vunpack.c.l.b16 %v1115
    %v1155 = vunpack.c.l.b16 %v1116
    %v1156 = vunpack.c.l.b16 %v1117
    %v1157 = vunpack.c.l.b16 %v1118
    %v1158 = vunpack.c.l.b16 %v1119
    %v1159 = vunpack.c.l.b16 %v1120
    %v1160 = vunpack.c.l.b16 %v1121
    %v1161 = vunpack.c.l.b16 %v1122
    %v1162 = vunpack.c.l.b16 %v1123
    %v1163 = vunpack.c.l.b16 %v1124
    %v1164 = vunpack.c.l.b16 %v1125
    %v1165 = vunpack.c.l.b16 %v1126
    %v1166 = vunpack.c.l.b16 %v1127
    %v1167 = vpack.c.b16 %v1152, %v1151
    %v1168 = vpack.c.b16 %v1154, %v1153
    %v1169 = vpack.c.b16 %v1156, %v1155
    %v1170 = vpack.c.b16 %v1158, %v1157
    %v1171 = vpack.c.b16 %v1160, %v1159
    %v1172 = vpack.c.b16 %v1162, %v1161
    %v1173 = vpack.c.b16 %v1164, %v1163
    %v1174 = vpack.c.b16 %v1166, %v1165
    %1183 = vmatprep.subr.bf16.mxu0 0
    %1184 = vmatpush1.bf16.msra.mxu0 %v1174
    %1185 = vmatprep.subr.bf16.mxu0 0
    %1186 = vmatpush1.bf16.msra.mxu0 %v1173
    %1187 = vmatprep.subr.bf16.mxu0 0
    %1188 = vmatpush1.bf16.msra.mxu0 %v1172
    %1189 = vmatprep.subr.bf16.mxu0 0
    %1190 = vmatpush1.bf16.msra.mxu0 %v1171
    %1191 = vmatprep.subr.bf16.mxu0 0
    %1192 = vmatpush1.bf16.msra.mxu0 %v1170
    %1193 = vmatprep.subr.bf16.mxu0 0
    %1194 = vmatpush1.bf16.msra.mxu0 %v1169
    %1195 = vmatprep.subr.bf16.mxu0 0
    %1196 = vmatpush1.bf16.msra.mxu0 %v1168
    %1197 = vmatprep.subr.bf16.mxu0 0
    %1198 = vmatpush1.bf16.msra.mxu0 %v1167
    %1199 = vmatprep.subr.bf16.mxu0 0
    %1200 = vmatpush2.bf16.msra.mxu0 0
    %1201 = vmatprep.subr.bf16.mxu0 0
    %1202 = vmatpush2.bf16.msra.mxu0 0
    %1203 = vmatprep.subr.bf16.mxu0 0
    %1204 = vmatpush2.bf16.msra.mxu0 0
    %1205 = vmatprep.subr.bf16.mxu0 0
    %1206 = vmatpush2.bf16.msra.mxu0 0
    %1207 = vmatprep.subr.bf16.mxu0 0
    %1208 = vmatpush2.bf16.msra.mxu0 0
    %1209 = vmatprep.subr.bf16.mxu0 0
    %1210 = vmatpush2.bf16.msra.mxu0 0
    %1211 = vmatprep.subr.bf16.mxu0 0
    %1212 = vmatpush2.bf16.msra.mxu0 0
    %1213 = vmatprep.subr.bf16.mxu0 0
    %1214 = vmatpush2.bf16.msra.mxu0 0
    %1215 = vmatprep.mubr.bf16.mxu0 0
    %1216 = vmatmul.mubr.bf16.gmra.mxu0 %v1096
    %v1217 = vpop.f32.mrf.mxu0
    %v1218 = vadd.f32 %v1133, %v1217
    %v1219 = vpop.f32.mrf.mxu0
    %v1220 = vpop.f32.mrf.mxu0
    %v1221 = vadd.f32 %v1133, %v1220
    %v1222 = vpop.f32.mrf.mxu0
    %1223 = vmatprep.mubr.bf16.mxu0 0
    %1224 = vmatmul.mubr.bf16.gmra.mxu0 %v1097
    %v1225 = vpop.f32.mrf.mxu0
    %v1226 = vadd.f32 %v1133, %v1225
    %v1227 = vpop.f32.mrf.mxu0
    %v1228 = vpop.f32.mrf.mxu0
    %v1229 = vadd.f32 %v1133, %v1228
    %v1230 = vpop.f32.mrf.mxu0
    %1231 = vmatprep.mubr.bf16.mxu0 0
    %1232 = vmatmul.mubr.bf16.gmra.mxu0 %v1098
    %v1233 = vpop.f32.mrf.mxu0
    %v1234 = vadd.f32 %v1133, %v1233
    %v1235 = vpop.f32.mrf.mxu0
    %v1236 = vpop.f32.mrf.mxu0
    %v1237 = vadd.f32 %v1133, %v1236
    %v1238 = vpop.f32.mrf.mxu0
    %1239 = vmatprep.mubr.bf16.mxu0 0
    %1240 = vmatmul.mubr.bf16.gmra.mxu0 %v1099
    %v1241 = vpop.f32.mrf.mxu0
    %v1242 = vadd.f32 %v1133, %v1241
    %v1243 = vpop.f32.mrf.mxu0
    %v1244 = vpop.f32.mrf.mxu0
    %v1245 = vadd.f32 %v1133, %v1244
    %v1246 = vpop.f32.mrf.mxu0
    %1247 = vmatprep.mubr.bf16.mxu0 0
    %1248 = vmatmul.mubr.bf16.gmra.mxu0 %v1100
    %v1249 = vpop.f32.mrf.mxu0
    %v1250 = vadd.f32 %v1133, %v1249
    %v1251 = vpop.f32.mrf.mxu0
    %v1252 = vpop.f32.mrf.mxu0
    %v1253 = vadd.f32 %v1133, %v1252
    %v1254 = vpop.f32.mrf.mxu0
    %1255 = vmatprep.mubr.bf16.mxu0 0
    %1256 = vmatmul.mubr.bf16.gmra.mxu0 %v1101
    %v1257 = vpop.f32.mrf.mxu0
    %v1258 = vadd.f32 %v1133, %v1257
    %v1259 = vpop.f32.mrf.mxu0
    %v1260 = vpop.f32.mrf.mxu0
    %v1261 = vadd.f32 %v1133, %v1260
    %v1262 = vpop.f32.mrf.mxu0
    %1263 = vmatprep.mubr.bf16.mxu0 0
    %1264 = vmatmul.mubr.bf16.gmra.mxu0 %v1102
    %v1265 = vpop.f32.mrf.mxu0
    %v1266 = vadd.f32 %v1133, %v1265
    %v1267 = vpop.f32.mrf.mxu0
    %v1268 = vpop.f32.mrf.mxu0
    %v1269 = vadd.f32 %v1133, %v1268
    %v1270 = vpop.f32.mrf.mxu0
    %1271 = vmatprep.mubr.bf16.mxu0 0
    %1272 = vmatmul.mubr.bf16.gmra.mxu0 %v1103
    %v1273 = vpop.f32.mrf.mxu0
    %v1274 = vadd.f32 %v1133, %v1273
    %v1275 = vpop.f32.mrf.mxu0
    %v1276 = vpop.f32.mrf.mxu0
    %v1277 = vadd.f32 %v1133, %v1276
    %v1278 = vpop.f32.mrf.mxu0
    %1279 = vmatprep.mubr.bf16.mxu0 0
    %1280 = vmatmul.mubr.bf16.gmra.mxu0 %v1104
    %v1281 = vpop.f32.mrf.mxu0
    %v1282 = vadd.f32 %v1133, %v1281
    %v1283 = vpop.f32.mrf.mxu0
    %v1284 = vpop.f32.mrf.mxu0
    %v1285 = vadd.f32 %v1133, %v1284
    %v1286 = vpop.f32.mrf.mxu0
    %1287 = vmatprep.mubr.bf16.mxu0 0
    %1288 = vmatmul.mubr.bf16.gmra.mxu0 %v1105
    %v1289 = vpop.f32.mrf.mxu0
    %v1290 = vadd.f32 %v1133, %v1289
    %v1291 = vpop.f32.mrf.mxu0
    %v1292 = vpop.f32.mrf.mxu0
    %v1293 = vadd.f32 %v1133, %v1292
    %v1294 = vpop.f32.mrf.mxu0
    %1295 = vmatprep.mubr.bf16.mxu0 0
    %1296 = vmatmul.mubr.bf16.gmra.mxu0 %v1106
    %v1297 = vpop.f32.mrf.mxu0
    %v1298 = vadd.f32 %v1133, %v1297
    %v1299 = vpop.f32.mrf.mxu0
    %v1300 = vpop.f32.mrf.mxu0
    %v1301 = vadd.f32 %v1133, %v1300
    %v1302 = vpop.f32.mrf.mxu0
    %1303 = vmatprep.mubr.bf16.mxu0 0
    %1304 = vmatmul.mubr.bf16.gmra.mxu0 %v1107
    %v1305 = vpop.f32.mrf.mxu0
    %v1306 = vadd.f32 %v1133, %v1305
    %v1307 = vpop.f32.mrf.mxu0
    %v1308 = vpop.f32.mrf.mxu0
    %v1309 = vadd.f32 %v1133, %v1308
    %v1310 = vpop.f32.mrf.mxu0
    %1311 = vmatprep.mubr.bf16.mxu0 0
    %1312 = vmatmul.mubr.bf16.gmra.mxu0 %v1108
    %v1313 = vpop.f32.mrf.mxu0
    %v1314 = vadd.f32 %v1133, %v1313
    %v1315 = vpop.f32.mrf.mxu0
    %v1316 = vpop.f32.mrf.mxu0
    %v1317 = vadd.f32 %v1133, %v1316
    %v1318 = vpop.f32.mrf.mxu0
    %1319 = vmatprep.mubr.bf16.mxu0 0
    %1320 = vmatmul.mubr.bf16.gmra.mxu0 %v1109
    %v1321 = vpop.f32.mrf.mxu0
    %v1322 = vadd.f32 %v1133, %v1321
    %v1323 = vpop.f32.mrf.mxu0
    %v1324 = vpop.f32.mrf.mxu0
    %v1325 = vadd.f32 %v1133, %v1324
    %v1326 = vpop.f32.mrf.mxu0
    %1327 = vmatprep.mubr.bf16.mxu0 0
    %1328 = vmatmul.mubr.bf16.gmra.mxu0 %v1110
    %v1329 = vpop.f32.mrf.mxu0
    %v1330 = vadd.f32 %v1133, %v1329
    %v1331 = vpop.f32.mrf.mxu0
    %v1332 = vpop.f32.mrf.mxu0
    %v1333 = vadd.f32 %v1133, %v1332
    %v1334 = vpop.f32.mrf.mxu0
    %1335 = vmatprep.mubr.bf16.mxu0 0
    %1336 = vmatmul.mubr.bf16.gmra.mxu0 %v1111
    %v1337 = vpop.f32.mrf.mxu0
    %v1338 = vadd.f32 %v1133, %v1337
    %v1339 = vpop.f32.mrf.mxu0
    %v1340 = vpop.f32.mrf.mxu0
    %v1341 = vadd.f32 %v1133, %v1340
    %v1342 = vpop.f32.mrf.mxu0
    %1343 = vdwg.mxu0
    %v1344 = vsub.f32 0.0, %v1218
    %v1345 = vsub.f32 0.0, %v1221
    %v1346 = vsub.f32 0.0, %v1226
    %v1347 = vsub.f32 0.0, %v1229
    %v1348 = vsub.f32 0.0, %v1234
    %v1349 = vsub.f32 0.0, %v1237
    %v1350 = vsub.f32 0.0, %v1242
    %v1351 = vsub.f32 0.0, %v1245
    %v1352 = vsub.f32 0.0, %v1250
    %v1353 = vsub.f32 0.0, %v1253
    %v1354 = vsub.f32 0.0, %v1258
    %v1355 = vsub.f32 0.0, %v1261
    %v1356 = vsub.f32 0.0, %v1266
    %v1357 = vsub.f32 0.0, %v1269
    %v1358 = vsub.f32 0.0, %v1274
    %v1359 = vsub.f32 0.0, %v1277
    %v1360 = vsub.f32 0.0, %v1282
    %v1361 = vsub.f32 0.0, %v1285
    %v1362 = vsub.f32 0.0, %v1290
    %v1363 = vsub.f32 0.0, %v1293
    %v1364 = vsub.f32 0.0, %v1298
    %v1365 = vsub.f32 0.0, %v1301
    %v1366 = vsub.f32 0.0, %v1306
    %v1367 = vsub.f32 0.0, %v1309
    %v1368 = vsub.f32 0.0, %v1314
    %v1369 = vsub.f32 0.0, %v1317
    %v1370 = vsub.f32 0.0, %v1322
    %v1371 = vsub.f32 0.0, %v1325
    %v1372 = vsub.f32 0.0, %v1330
    %v1373 = vsub.f32 0.0, %v1333
    %v1374 = vsub.f32 0.0, %v1338
    %v1375 = vsub.f32 0.0, %v1341
    %v1376 = vmul.f32 %v1344, 1.442695
    %v1377 = vpow.pop %v1376
    %v1378 = vmul.f32 %v1345, 1.442695
    %v1379 = vpow.pop %v1378
    %v1380 = vmul.f32 %v1346, 1.442695
    %v1381 = vpow.pop %v1380
    %v1382 = vmul.f32 %v1347, 1.442695
    %v1383 = vpow.pop %v1382
    %v1384 = vmul.f32 %v1348, 1.442695
    %v1385 = vpow.pop %v1384
    %v1386 = vmul.f32 %v1349, 1.442695
    %v1387 = vpow.pop %v1386
    %v1388 = vmul.f32 %v1350, 1.442695
    %v1389 = vpow.pop %v1388
    %v1390 = vmul.f32 %v1351, 1.442695
    %v1391 = vpow.pop %v1390
    %v1392 = vmul.f32 %v1352, 1.442695
    %v1393 = vpow.pop %v1392
    %v1394 = vmul.f32 %v1353, 1.442695
    %v1395 = vpow.pop %v1394
    %v1396 = vmul.f32 %v1354, 1.442695
    %v1397 = vpow.pop %v1396
    %v1398 = vmul.f32 %v1355, 1.442695
    %v1399 = vpow.pop %v1398
    %v1400 = vmul.f32 %v1356, 1.442695
    %v1401 = vpow.pop %v1400
    %v1402 = vmul.f32 %v1357, 1.442695
    %v1403 = vpow.pop %v1402
    %v1404 = vmul.f32 %v1358, 1.442695
    %v1405 = vpow.pop %v1404
    %v1406 = vmul.f32 %v1359, 1.442695
    %v1407 = vpow.pop %v1406
    %v1408 = vmul.f32 %v1360, 1.442695
    %v1409 = vpow.pop %v1408
    %v1410 = vmul.f32 %v1361, 1.442695
    %v1411 = vpow.pop %v1410
    %v1412 = vmul.f32 %v1362, 1.442695
    %v1413 = vpow.pop %v1412
    %v1414 = vmul.f32 %v1363, 1.442695
    %v1415 = vpow.pop %v1414
    %v1416 = vmul.f32 %v1364, 1.442695
    %v1417 = vpow.pop %v1416
    %v1418 = vmul.f32 %v1365, 1.442695
    %v1419 = vpow.pop %v1418
    %v1420 = vmul.f32 %v1366, 1.442695
    %v1421 = vpow.pop %v1420
    %v1422 = vmul.f32 %v1367, 1.442695
    %v1423 = vpow.pop %v1422
    %v1424 = vmul.f32 %v1368, 1.442695
    %v1425 = vpow.pop %v1424
    %v1426 = vmul.f32 %v1369, 1.442695
    %v1427 = vpow.pop %v1426
    %v1428 = vmul.f32 %v1370, 1.442695
    %v1429 = vpow.pop %v1428
    %v1430 = vmul.f32 %v1371, 1.442695
    %v1431 = vpow.pop %v1430
    %v1432 = vmul.f32 %v1372, 1.442695
    %v1433 = vpow.pop %v1432
    %v1434 = vmul.f32 %v1373, 1.442695
    %v1435 = vpow.pop %v1434
    %v1436 = vmul.f32 %v1374, 1.442695
    %v1437 = vpow.pop %v1436
    %v1438 = vmul.f32 %v1375, 1.442695
    %v1439 = vpow.pop %v1438
    %v1440 = vadd.f32 %v1377, 1.0
    %v1441 = vadd.f32 %v1379, 1.0
    %v1442 = vadd.f32 %v1381, 1.0
    %v1443 = vadd.f32 %v1383, 1.0
    %v1444 = vadd.f32 %v1385, 1.0
    %v1445 = vadd.f32 %v1387, 1.0
    %v1446 = vadd.f32 %v1389, 1.0
    %v1447 = vadd.f32 %v1391, 1.0
    %v1448 = vadd.f32 %v1393, 1.0
    %v1449 = vadd.f32 %v1395, 1.0
    %v1450 = vadd.f32 %v1397, 1.0
    %v1451 = vadd.f32 %v1399, 1.0
    %v1452 = vadd.f32 %v1401, 1.0
    %v1453 = vadd.f32 %v1403, 1.0
    %v1454 = vadd.f32 %v1405, 1.0
    %v1455 = vadd.f32 %v1407, 1.0
    %v1456 = vadd.f32 %v1409, 1.0
    %v1457 = vadd.f32 %v1411, 1.0
    %v1458 = vadd.f32 %v1413, 1.0
    %v1459 = vadd.f32 %v1415, 1.0
    %v1460 = vadd.f32 %v1417, 1.0
    %v1461 = vadd.f32 %v1419, 1.0
    %v1462 = vadd.f32 %v1421, 1.0
    %v1463 = vadd.f32 %v1423, 1.0
    %v1464 = vadd.f32 %v1425, 1.0
    %v1465 = vadd.f32 %v1427, 1.0
    %v1466 = vadd.f32 %v1429, 1.0
    %v1467 = vadd.f32 %v1431, 1.0
    %v1468 = vadd.f32 %v1433, 1.0
    %v1469 = vadd.f32 %v1435, 1.0
    %v1470 = vadd.f32 %v1437, 1.0
    %v1471 = vadd.f32 %v1439, 1.0
    %v1472 = vrcp.pop %v1440
    %v1473 = vrcp.pop %v1441
    %v1474 = vrcp.pop %v1442
    %v1475 = vrcp.pop %v1443
    %v1476 = vrcp.pop %v1444
    %v1477 = vrcp.pop %v1445
    %v1478 = vrcp.pop %v1446
    %v1479 = vrcp.pop %v1447
    %v1480 = vrcp.pop %v1448
    %v1481 = vrcp.pop %v1449
    %v1482 = vrcp.pop %v1450
    %v1483 = vrcp.pop %v1451
    %v1484 = vrcp.pop %v1452
    %v1485 = vrcp.pop %v1453
    %v1486 = vrcp.pop %v1454
    %v1487 = vrcp.pop %v1455
    %v1488 = vrcp.pop %v1456
    %v1489 = vrcp.pop %v1457
    %v1490 = vrcp.pop %v1458
    %v1491 = vrcp.pop %v1459
    %v1492 = vrcp.pop %v1460
    %v1493 = vrcp.pop %v1461
    %v1494 = vrcp.pop %v1462
    %v1495 = vrcp.pop %v1463
    %v1496 = vrcp.pop %v1464
    %v1497 = vrcp.pop %v1465
    %v1498 = vrcp.pop %v1466
    %v1499 = vrcp.pop %v1467
    %v1500 = vrcp.pop %v1468
    %v1501 = vrcp.pop %v1469
    %v1502 = vrcp.pop %v1470
    %v1503 = vrcp.pop %v1471
    %1504 = vst [vmem:[#allocation10] sm:$0xff] %v1472
    %1505 = vst [vmem:[#allocation10 + $0x8] sm:$0xff] %v1473
    %1506 = vst [vmem:[#allocation10 + $0x10] sm:$0xff] %v1474
    %1507 = vst [vmem:[#allocation10 + $0x18] sm:$0xff] %v1475
    %1508 = vst [vmem:[#allocation10 + $0x20] sm:$0xff] %v1476
    %1509 = vst [vmem:[#allocation10 + $0x28] sm:$0xff] %v1477
    %1510 = vst [vmem:[#allocation10 + $0x30] sm:$0xff] %v1478
    %1511 = vst [vmem:[#allocation10 + $0x38] sm:$0xff] %v1479
    %1512 = vst [vmem:[#allocation10 + $0x40] sm:$0xff] %v1480
    %1513 = vst [vmem:[#allocation10 + $0x48] sm:$0xff] %v1481
    %1514 = vst [vmem:[#allocation10 + $0x50] sm:$0xff] %v1482
    %1515 = vst [vmem:[#allocation10 + $0x58] sm:$0xff] %v1483
    %1516 = vst [vmem:[#allocation10 + $0x60] sm:$0xff] %v1484
    %1517 = vst [vmem:[#allocation10 + $0x68] sm:$0xff] %v1485
    %1518 = vst [vmem:[#allocation10 + $0x70] sm:$0xff] %v1486
    %1519 = vst [vmem:[#allocation10 + $0x78] sm:$0xff] %v1487
    %1520 = vst [vmem:[#allocation10 + $0x80] sm:$0xff] %v1488
    %1521 = vst [vmem:[#allocation10 + $0x88] sm:$0xff] %v1489
    %1522 = vst [vmem:[#allocation10 + $0x90] sm:$0xff] %v1490
    %1523 = vst [vmem:[#allocation10 + $0x98] sm:$0xff] %v1491
    %1524 = vst [vmem:[#allocation10 + $0xa0] sm:$0xff] %v1492
    %1525 = vst [vmem:[#allocation10 + $0xa8] sm:$0xff] %v1493
    %1526 = vst [vmem:[#allocation10 + $0xb0] sm:$0xff] %v1494
    %1527 = vst [vmem:[#allocation10 + $0xb8] sm:$0xff] %v1495
    %1528 = vst [vmem:[#allocation10 + $0xc0] sm:$0xff] %v1496
    %1529 = vst [vmem:[#allocation10 + $0xc8] sm:$0xff] %v1497
    %1530 = vst [vmem:[#allocation10 + $0xd0] sm:$0xff] %v1498
    %1531 = vst [vmem:[#allocation10 + $0xd8] sm:$0xff] %v1499
    %1532 = vst [vmem:[#allocation10 + $0xe0] sm:$0xff] %v1500
    %1533 = vst [vmem:[#allocation10 + $0xe8] sm:$0xff] %v1501
    %1534 = vst [vmem:[#allocation10 + $0xf0] sm:$0xff] %v1502
    %1535 = vst [vmem:[#allocation10 + $0xf8] sm:$0xff] %v1503
    // Predicated region
    $region46: #{tpu_custom_call.1} parent=1 // pred_check
      _
    $region47: #{tpu_custom_call.1} parent=1 // pred_check_branch
      %1537 = sbr.rel (0) target = $region49
    $region48: #{tpu_custom_call.1} parent=1 // pred_region
      %s1539 = ssub.s32 4096, 4096
      %1540 = vsyncadd [#allocation4], %s1539
      %s1541 = sshll.u32 [#allocation10], 4
      %s1542 = int_to_ptr.vmem [resolvable:$true] %s1541
      %1547 = dma.vmem_to_hbm [thread:$0]  %s1542, 4096, %s7, [#allocation4], 128, 128, 8
    $region49: #{tpu_custom_call.1} parent=1 // pred_fallthru
      _
    // Predicated region
    $region50: #{tpu_custom_call.1} parent=1 // pred_check
      _
    $region51: #{tpu_custom_call.1} parent=1 // pred_check_branch
      %1549 = sbr.rel (0) target = $region53
    $region52: #{tpu_custom_call.1} parent=1 // pred_region
      %1550 = dma.done [#allocation4], 4096
    $region53: #{tpu_custom_call.1} parent=1 // pred_fallthru
      _
    %1551 = vsyncpa [#allocation3], 1
    %1552 = vsyncpa [#allocation6], 1
    %1553 = vsyncpa [#allocation9], 1
    %1554 = vsyncpa [#allocation4], 1

</llo_original>
